<compile_context>
chip_gen: v5e
topology: v5e:2x2
jax: 0.10.0
libtpu: 0.0.40
codegen_flags: <defaults>
</compile_context>

<pallas_src>
import jax
import jax.numpy as jnp
from jax.experimental import pallas as pl
from jax.experimental.pallas import tpu as pltpu

MAX_K = 10
BUFFER_SIZE = 50
HIDDEN_DIM = 32

_LANES = 128
_SUBLANES = 8
_CHUNK_ROWS = 128            # 128 x 128 f32 = 64 KiB per in-kernel store chunk
_MIN_PALLAS_ELEMS = 1 << 16  # below this output size, plain XLA broadcast wins


def _round_up(a, b):
    return (a + b - 1) // b * b


def _broadcast_relu_bias_kernel(bias_row_ref, o_ref):
    """Broadcast-store relu(bias) across one (TILE_R, 128) output tile.

    bias_row_ref: (1, 128) f32 -- nn.Linear(1, H).bias tiled 128//H times
                  along the lane axis (constant index_map: DMA'd once).
    o_ref:        (TILE_R, 128) f32 -- output tile; the row-major flattening
                  of the full (rows, 128) slab equals the flattening of
                  (B, S, H).

    The hfd input of the reference module is identically zero (see module
    docstring), so Linear(1->H)(hfd) + ReLU degenerates to relu(bias).
    """
    # TODO(synk): a real per-timestep HFD would need hfd streamed per
    # 128//H-position group here (w * hfd + b before the ReLU) plus a real
    # close-price scan feeding it; this layout assumes hfd is constant.
    tile_rows = o_ref.shape[0]
    y_row = jnp.maximum(bias_row_ref[...], 0.0)                 # (1, 128)

    chunk_rows = min(_CHUNK_ROWS, tile_rows)                    # static
    chunk = jnp.broadcast_to(y_row, (chunk_rows, _LANES))       # hoisted once
    n_full = tile_rows // chunk_rows

    def body(c, carry):
        start = pl.multiple_of(c * chunk_rows, chunk_rows)
        o_ref[pl.ds(start, chunk_rows), :] = chunk               # full-lane vst
        return carry

    jax.lax.fori_loop(0, n_full, body, 0, unroll=True)

    rem = tile_rows - n_full * chunk_rows                        # static
    if rem > 0:
        o_ref[pl.ds(n_full * chunk_rows, rem), :] = jnp.broadcast_to(
            y_row, (rem, _LANES))


def fractal_dimension_layer(x, weight, bias, max_k=MAX_K, *,
                            tile_rows=8192, use_pallas=None):
    """JAX/Pallas equivalent of FractalDimensionLayer.forward.

    x:      (B, S, F) with F >= 4   (feature index 3 = close price)
    weight: (H, 1)                  (nn.Linear(1, H).weight; it multiplies the
                                     always-zero hfd, so only bias survives)
    bias:   (H,)                    (nn.Linear(1, H).bias)
    use_pallas: None -> auto (Pallas only when the output is large enough),
                True / False -> force the corresponding path.
    returns (B, S, H) float32
    """
    B, S, F = x.shape
    H = weight.shape[0]
    assert F >= 4

    # Faithful extraction of the close-price series.  Dead downstream: the
    # reference HFD computation degenerates to 0 at every timestep.
    _close = x[:, :, 3]
    del _close

    bias = bias.reshape(H).astype(jnp.float32)
    N = B * S
    total = N * H

    # The transpose-free layout needs H to divide the 128-lane width; small
    # problems are launch-overhead-bound, so both cases take the XLA path
    # (which may fuse into downstream consumers and never materialize).
    pallas_ok = (_LANES % H == 0)
    if use_pallas is None:
        use_pallas = pallas_ok and total >= _MIN_PALLAS_ELEMS
    if not (use_pallas and pallas_ok):
        return jnp.broadcast_to(jnp.maximum(bias, 0.0), (B, S, H))

    reps = _LANES // H
    bias_row = jnp.tile(bias.reshape(1, H), (1, reps))           # (1, 128)

    rows = (total + _LANES - 1) // _LANES        # 128-lane rows needed
    r_pad = _round_up(rows, _SUBLANES)
    tr = min(_round_up(tile_rows, _SUBLANES), r_pad)
    # Keep >= 2 grid steps when the slab is splittable so v7x's two
    # TensorCores both participate (the grid axis is "parallel").
    if tr == r_pad and r_pad >= 2 * _SUBLANES and r_pad % (2 * _SUBLANES) == 0:
        tr = r_pad // 2
    r_pad = _round_up(r_pad, tr)
    grid = (r_pad // tr,)

    out2d = pl.pallas_call(
        _broadcast_relu_bias_kernel,
        out_shape=jax.ShapeDtypeStruct((r_pad, _LANES), jnp.float32),
        grid=grid,
        in_specs=[
            # Constant index_map: the (1, 128) bias row is DMA'd once and
            # stays resident in VMEM across all grid steps.
            pl.BlockSpec((1, _LANES), lambda i: (0, 0)),
        ],
        out_specs=pl.BlockSpec((tr, _LANES), lambda i: (i, 0)),
        compiler_params=pltpu.CompilerParams(
            dimension_semantics=("parallel",)),
        # Default tile: 8192 x 128 f32 = 4 MiB per buffer, 8 MiB double-
        # buffered -- inside every generation's default scoped VMEM (v5e
        # 16 MiB, v6e/v7x 32 MiB), so no vmem_limit_bytes override is needed.
    )(bias_row)

    if r_pad * _LANES == total:
        return out2d.reshape(B, S, H)            # pure reshape, no relayout
    return out2d.reshape(-1)[:total].reshape(B, S, H)


if __name__ == "__main__":
    key = jax.random.PRNGKey(0)
    kx, kw, kb = jax.random.split(key, 3)

    B, S, F = 2, 16, 5            # batch=2, seq=16, features=5 (index 3 = close)
    x = jax.random.normal(kx, (B, S, F), dtype=jnp.float32)

    # Deterministic nn.Linear(1, HIDDEN_DIM) parameters (fan_in = 1 -> bound = 1).
    weight = jax.random.uniform(kw, (HIDDEN_DIM, 1), minval=-1.0, maxval=1.0,
                                dtype=jnp.float32)
    bias = jax.random.uniform(kb, (HIDDEN_DIM,), minval=-1.0, maxval=1.0,
                              dtype=jnp.float32)

    # Pure-JAX reference of the exact forward semantics: every hfd value is 0,
    # so the output is relu(0 @ W.T + bias) broadcast over (B, S).
    hfd_ref = jnp.zeros((B, S, 1), dtype=jnp.float32)
    ref = jnp.maximum(hfd_ref @ weight.T + bias, 0.0)

    # 1) Force the Pallas path so the kernel itself is exercised.
    out = fractal_dimension_layer(x, weight, bias, use_pallas=True)
    out = jax.block_until_ready(out)
    assert out.shape == (B, S, HIDDEN_DIM), out.shape
    assert jnp.allclose(out, ref, atol=1e-6), float(jnp.max(jnp.abs(out - ref)))

    # 2) Auto path at this small size takes the XLA broadcast; must match too.
    out_auto = jax.block_until_ready(fractal_dimension_layer(x, weight, bias))
    assert jnp.allclose(out_auto, ref, atol=1e-6)

    # 3) A slightly larger case that exercises the multi-step parallel grid
    #    (rows > one tile) through the forced Pallas path.
    B2, S2 = 4, 512
    x2 = jax.random.normal(kx, (B2, S2, F), dtype=jnp.float32)
    out2 = jax.block_until_ready(
        fractal_dimension_layer(x2, weight, bias, use_pallas=True))
    ref2 = jnp.broadcast_to(jnp.maximum(bias, 0.0), (B2, S2, HIDDEN_DIM))
    assert out2.shape == (B2, S2, HIDDEN_DIM), out2.shape
    assert jnp.allclose(out2, ref2, atol=1e-6)

    print("KERNEL_OK")
</pallas_src>

<mosaic_0001>
module attributes {stable_mosaic.version = 11 : i64} {
  func.func @_broadcast_relu_bias_kernel(%arg0: i32, %arg1: memref<1x128xf32, #tpu.memory_space<vmem>>, %arg2: memref<8x128xf32, #tpu.memory_space<vmem>>) attributes {dimension_semantics = [#tpu.dimension_semantics<parallel>], iteration_bounds = array<i64: 1>, scalar_prefetch = 0 : i64, scratch_operands = 0 : i64, tpu.core_type = #tpu.core_type<tc>, window_params = [{pipeline_mode = #tpu.pipeline_mode<synchronous>, transform_indices = @transform_0, window_bounds = array<i64: 1, 128>}, {transform_indices = @transform_1, window_bounds = array<i64: 8, 128>}]} {
    %c0 = arith.constant 0 : index
    %c0_0 = arith.constant 0 : index
    %0 = vector.load %arg1[%c0, %c0_0] : memref<1x128xf32, #tpu.memory_space<vmem>>, vector<1x128xf32>
    %cst = arith.constant 0.000000e+00 : f32
    %1 = vector.broadcast %cst : f32 to vector<1x128xf32>
    %2 = arith.maximumf %0, %1 : vector<1x128xf32>
    %3 = vector.shape_cast %2 : vector<1x128xf32> to vector<1x128xf32>
    %4 = vector.broadcast %3 : vector<1x128xf32> to vector<8x128xf32>
    %c0_i32 = arith.constant 0 : i32
    %c8_i32 = arith.constant 8 : i32
    %5 = arith.muli %c0_i32, %c8_i32 : i32
    %6 = tpu.assume_multiple %5, 8 : i32
    %7 = arith.index_cast %6 : i32 to index
    %c0_1 = arith.constant 0 : index
    %8 = vector.load %arg2[%7, %c0_1] : memref<8x128xf32, #tpu.memory_space<vmem>>, vector<8x128xf32>
    tpu.vector_store %arg2[%7, %c0_1], %4 {strides = array<i32>} : memref<8x128xf32, #tpu.memory_space<vmem>>, vector<8x128xf32>,
    %c1_i32 = arith.constant 1 : i32
    return
  }
  func.func @transform_0(%arg0: i32) -> (i32, i32) {
    %c0_i32 = arith.constant 0 : i32
    %c0_i32_0 = arith.constant 0 : i32
    %c0_i32_1 = arith.constant 0 : i32
    return %c0_i32, %c0_i32_0 : i32, i32
  }
  func.func @transform_1(%arg0: i32) -> (i32, i32) {
    %c0_i32 = arith.constant 0 : i32
    %c0_i32_0 = arith.constant 0 : i32
    return %arg0, %c0_i32 : i32, i32
  }
}

</mosaic_0001>

<llo_original>
// kernel: tpu_custom_call.1
$region0: #{tpu_custom_call.1}
  #allocation0 [shape = 'u32[]', space=smem, size = 0x4, offset = 0x4, fixed_abs, tag = 'smem constant byte address 0x4 - core index']
  #allocation1 [shape = 'u32[72,128]{1,0:T(1,128)}', space=vmem, size = 0x9000, scoped, tag = 'internal scratch']
  %s0 = inlined_call_operand.hbm [shape: f32[1,128], index: 0, kind: input, shape index: {}]
  %s1 = inlined_call_operand.hbm [shape: f32[8,128], index: 1, kind: output, shape index: {}]
  %s2 = sld [smem:[#allocation0]]
  $region18: #{tpu_custom_call.1} parent=0
    _
  %s4 = ssub.s32 1, %s2
  %s5 = scalar_select 0, %s4, %s2
  $region1: #{tpu_custom_call.1} parent=0
    #allocation2 [shape = 'u8[512]{0}', space=vmem, size = 0x400, scoped, tag = 'input window, operand 0, single buffered']
    #allocation3 [shape = 's32[1]{0}', space=sflag, size = 0x4, scoped, tag = 'scoped memory for tpu_custom_call.1']
    #allocation4 [shape = 's32[1]{0}', space=sflag, size = 0x4, scoped, tag = 'scoped memory for tpu_custom_call.1']
    #allocation5 [shape = 'u8[4096]{0}', space=vmem, size = 0x1000, scoped, tag = 'output window, operand 0, single buffered']
    %6 = vsyncpa [#allocation3], 0
    %7 = vsyncpa [#allocation4], 0
    // Predicated region
    $region2: #{tpu_custom_call.1} parent=1 // pred_check
      _
    $region3: #{tpu_custom_call.1} parent=1 // pred_check_branch
      %9 = sbr.rel (0) target = $region5
    $region4: #{tpu_custom_call.1} parent=1 // pred_region
      %11 = vsyncadd [#allocation3], 0
      %s13 = sshll.u32 %s0, 4
      %s14 = int_to_ptr.hbm [resolvable:$true] %s13
      %s15 = sshll.u32 [#allocation2], 4
      %s16 = int_to_ptr.vmem [resolvable:$true] %s15
      %18 = dma.hbm_to_vmem [thread:$0]  %s14, 16, %s16, [#allocation3]
    $region5: #{tpu_custom_call.1} parent=1 // pred_fallthru
      _
    // Predicated region
    $region6: #{tpu_custom_call.1} parent=1 // pred_check
      _
    $region7: #{tpu_custom_call.1} parent=1 // pred_check_branch
      %20 = sbr.rel (0) target = $region9
    $region8: #{tpu_custom_call.1} parent=1 // pred_region
      %22 = dma.done [#allocation3], 16
    $region9: #{tpu_custom_call.1} parent=1 // pred_fallthru
      _
    %v23 = vld [vmem:[#allocation2] sm:$0x1]
    %v24 = vmax.f32 %v23, 0.0
    %v26 = vperm.slane %v24, 0
    %28 = vst [vmem:[#allocation5] sm:$0xff] %v26
    // Predicated region
    $region10: #{tpu_custom_call.1} parent=1 // pred_check
      _
    $region11: #{tpu_custom_call.1} parent=1 // pred_check_branch
      %30 = sbr.rel (0) target = $region13
    $region12: #{tpu_custom_call.1} parent=1 // pred_region
      %32 = vsyncadd [#allocation4], 0
      %s34 = sshll.u32 [#allocation5], 4
      %s35 = int_to_ptr.vmem [resolvable:$true] %s34
      %s36 = sshll.u32 %s1, 4
      %s37 = int_to_ptr.hbm [resolvable:$true] %s36
      %39 = dma.vmem_to_hbm [thread:$0]  %s35, 128, %s37, [#allocation4]
    $region13: #{tpu_custom_call.1} parent=1 // pred_fallthru
      _
    // Predicated region
    $region14: #{tpu_custom_call.1} parent=1 // pred_check
      _
    $region15: #{tpu_custom_call.1} parent=1 // pred_check_branch
      %41 = sbr.rel (0) target = $region17
    $region16: #{tpu_custom_call.1} parent=1 // pred_region
      %43 = dma.done [#allocation4], 128
    $region17: #{tpu_custom_call.1} parent=1 // pred_fallthru
      _
    %44 = vsyncpa [#allocation3], 1
    %45 = vsyncpa [#allocation4], 1

</llo_original>
